<compile_context>
chip_gen: v7x
topology: tpu7x:2x2x1
jax: 0.10.0
libtpu: 0.0.40
codegen_flags: <defaults>
</compile_context>

<pallas_src>
import functools

import jax
import jax.numpy as jnp
from jax.experimental import pallas as pl
from jax.experimental.pallas import tpu as pltpu

LANE = 128   # lane width: padded hidden / action feature dims
TB = 8       # batch tile (sublane multiple)


def policy_kernel(x_ref, w1_ref, b1_ref, w2_ref, b2_ref, w3_ref, b3_ref,
                  scale_ref, bias_ref, o_ref):
    # state tile: [TB, d_in] f32 -> bf16 operands for the MXU, f32 accumulate.
    x = x_ref[...].astype(jnp.bfloat16)
    h1 = jnp.dot(x, w1_ref[...], preferred_element_type=jnp.float32) + b1_ref[...]
    h1 = jnp.maximum(h1, 0.0)
    h2 = jnp.dot(h1.astype(jnp.bfloat16), w2_ref[...],
                 preferred_element_type=jnp.float32) + b2_ref[...]
    h2 = jnp.maximum(h2, 0.0)
    h3 = jnp.dot(h2.astype(jnp.bfloat16), w3_ref[...],
                 preferred_element_type=jnp.float32) + b3_ref[...]
    # tanh -> EUP; affine rescale -> VPU; lane-dense [TB, 128] store.
    o_ref[...] = jnp.tanh(h3) * scale_ref[...] + bias_ref[...]


@functools.partial(jax.jit, static_argnames=("num_actions",))
def policy_forward(state, params, num_actions):
    """Pallas-backed forward pass of DeterministicPolicy."""
    state = state.astype(jnp.float32)
    b, d_in = state.shape
    hp = params["w1"].shape[1]   # padded hidden dim (multiple of 128)
    ap = params["w3"].shape[1]   # padded action dim (multiple of 128)

    # Pad batch to a tile multiple only when needed (no-op in the common case).
    b_pad = ((b + TB - 1) // TB) * TB
    if b_pad != b:
        state = jnp.pad(state, ((0, b_pad - b), (0, 0)))

    const = lambda i: (0, 0)   # weights / biases stay VMEM-resident (no re-DMA)

    out = pl.pallas_call(
        policy_kernel,
        out_shape=jax.ShapeDtypeStruct((b_pad, ap), jnp.float32),
        grid_spec=pltpu.PrefetchScalarGridSpec(
            num_scalar_prefetch=0,
            grid=(b_pad // TB,),
            in_specs=[
                pl.BlockSpec((TB, d_in), lambda i: (i, 0)),   # state tile
                pl.BlockSpec((d_in, hp), const),              # W1  (bf16, resident)
                pl.BlockSpec((1, hp), const),                 # b1  (f32)
                pl.BlockSpec((hp, hp), const),                # W2  (bf16, resident)
                pl.BlockSpec((1, hp), const),                 # b2  (f32)
                pl.BlockSpec((hp, ap), const),                # W3  (bf16, resident)
                pl.BlockSpec((1, ap), const),                 # b3  (f32)
                pl.BlockSpec((1, ap), const),                 # action_scale
                pl.BlockSpec((1, ap), const),                 # action_bias
            ],
            out_specs=pl.BlockSpec((TB, ap), lambda i: (i, 0)),
        ),
        compiler_params=pltpu.CompilerParams(
            dimension_semantics=("parallel",),
            vmem_limit_bytes=16 * 1024 * 1024,   # safe within v7x's 64 MiB VMEM
        ),
    )(
        state,
        params["w1"], params["b1"],
        params["w2"], params["b2"],
        params["w3"], params["b3"],
        params["action_scale"], params["action_bias"],
    )
    # Drop batch / action padding (kernel stores stay lane-dense).
    return out[:b, :num_actions]


# ----------------------------- initialization -----------------------------

def _xavier_uniform(key, fan_in, fan_out):
    # torch.nn.init.xavier_uniform_(w, gain=1): U(-a, a), a = sqrt(6/(in+out))
    limit = (6.0 / (fan_in + fan_out)) ** 0.5
    # stored [in, out] (transposed from PyTorch's [out, in])
    return jax.random.uniform(key, (fan_in, fan_out), dtype=jnp.float32,
                              minval=-limit, maxval=limit)


def _round_up(x, m):
    return ((x + m - 1) // m) * m


def _pad2(w, rows, cols):
    return jnp.zeros((rows, cols), jnp.float32).at[: w.shape[0], : w.shape[1]].set(w)


def init_params(key, num_inputs, num_actions, hidden_dim, action_space=None):
    """Returns (kernel_params, f32_master_params).

    kernel_params: bf16 weights and f32 biases/scale/bias, pre-transposed to
    [in, out] and zero-padded to lane-aligned shapes (done once, off the hot path).
    """
    k1, k2, k3 = jax.random.split(key, 3)
    hp = _round_up(hidden_dim, LANE)
    ap = _round_up(num_actions, LANE)

    w1 = _xavier_uniform(k1, num_inputs, hidden_dim)
    w2 = _xavier_uniform(k2, hidden_dim, hidden_dim)
    w3 = _xavier_uniform(k3, hidden_dim, num_actions)

    if action_space is None:
        scale = jnp.ones((num_actions,), jnp.float32)
        bias = jnp.zeros((num_actions,), jnp.float32)
    else:
        scale = jnp.asarray((action_space.high - action_space.low) / 2.0, jnp.float32)
        bias = jnp.asarray((action_space.high + action_space.low) / 2.0, jnp.float32)

    kernel_params = {
        "w1": _pad2(w1, num_inputs, hp).astype(jnp.bfloat16),
        "b1": jnp.zeros((1, hp), jnp.float32),
        "w2": _pad2(w2, hp, hp).astype(jnp.bfloat16),
        "b2": jnp.zeros((1, hp), jnp.float32),
        "w3": _pad2(w3, hp, ap).astype(jnp.bfloat16),
        "b3": jnp.zeros((1, ap), jnp.float32),
        "action_scale": _pad2(scale[None, :], 1, ap),
        "action_bias": _pad2(bias[None, :], 1, ap),
    }
    masters = {
        "w1": w1, "b1": jnp.zeros((hidden_dim,), jnp.float32),
        "w2": w2, "b2": jnp.zeros((hidden_dim,), jnp.float32),
        "w3": w3, "b3": jnp.zeros((num_actions,), jnp.float32),
        "action_scale": scale, "action_bias": bias,
    }
    return kernel_params, masters


# ------------------------------- references -------------------------------

def reference_forward_f32(state, m):
    h1 = jnp.maximum(state @ m["w1"] + m["b1"], 0.0)
    h2 = jnp.maximum(h1 @ m["w2"] + m["b2"], 0.0)
    return jnp.tanh(h2 @ m["w3"] + m["b3"]) * m["action_scale"] + m["action_bias"]


def reference_forward_bf16(state, p, num_inputs, num_actions, hidden_dim):
    # Same bf16 operands / f32 accumulation as the kernel (padding contributes 0).
    w1 = p["w1"][:num_inputs, :hidden_dim]
    w2 = p["w2"][:hidden_dim, :hidden_dim]
    w3 = p["w3"][:hidden_dim, :num_actions]
    x = state.astype(jnp.bfloat16)
    h1 = jnp.maximum(jnp.dot(x, w1, preferred_element_type=jnp.float32)
                     + p["b1"][:, :hidden_dim], 0.0)
    h2 = jnp.maximum(jnp.dot(h1.astype(jnp.bfloat16), w2,
                             preferred_element_type=jnp.float32)
                     + p["b2"][:, :hidden_dim], 0.0)
    h3 = (jnp.dot(h2.astype(jnp.bfloat16), w3, preferred_element_type=jnp.float32)
          + p["b3"][:, :num_actions])
    return (jnp.tanh(h3) * p["action_scale"][:, :num_actions]
            + p["action_bias"][:, :num_actions])


# ---------------------------------- demo ----------------------------------

if __name__ == "__main__":
    num_inputs, num_actions, hidden_dim = 8, 3, 32
    batch = 16   # 2 batch tiles of TB=8 -> real 'parallel' grid

    key = jax.random.PRNGKey(0)
    kp, ks = jax.random.split(key)

    params, masters = init_params(kp, num_inputs, num_actions, hidden_dim,
                                  action_space=None)
    state = jax.random.normal(ks, (batch, num_inputs), dtype=jnp.float32)

    mean = policy_forward(state, params, num_actions)
    jax.block_until_ready(mean)
    assert mean.shape == (batch, num_actions)

    # Kernel correctness: same bf16-quantized operands, pure-JAX math.
    ref_bf16 = reference_forward_bf16(state, params, num_inputs, num_actions,
                                      hidden_dim)
    assert jnp.allclose(mean, ref_bf16, atol=1e-2, rtol=1e-2), (
        "kernel mismatch vs bf16-matched reference: "
        f"{float(jnp.max(jnp.abs(mean - ref_bf16)))}")

    # Module fidelity: f32 master weights (PyTorch semantics); tolerance covers
    # bf16 weight/activation quantization only (outputs are tanh-bounded).
    ref_f32 = reference_forward_f32(state, masters)
    assert jnp.allclose(mean, ref_f32, atol=7.5e-2, rtol=0.0), (
        "kernel drifted from f32 reference: "
        f"{float(jnp.max(jnp.abs(mean - ref_f32)))}")

    print("KERNEL_OK")
</pallas_src>

<mosaic_0001>
module attributes {stable_mosaic.version = 11 : i64} {
  func.func @policy_kernel(%arg0: i32, %arg1: memref<8x8xf32, #tpu.memory_space<vmem>>, %arg2: memref<8x128xbf16, #tpu.memory_space<vmem>>, %arg3: memref<1x128xf32, #tpu.memory_space<vmem>>, %arg4: memref<128x128xbf16, #tpu.memory_space<vmem>>, %arg5: memref<1x128xf32, #tpu.memory_space<vmem>>, %arg6: memref<128x128xbf16, #tpu.memory_space<vmem>>, %arg7: memref<1x128xf32, #tpu.memory_space<vmem>>, %arg8: memref<1x128xf32, #tpu.memory_space<vmem>>, %arg9: memref<1x128xf32, #tpu.memory_space<vmem>>, %arg10: memref<8x128xf32, #tpu.memory_space<vmem>>) attributes {dimension_semantics = [#tpu.dimension_semantics<parallel>], iteration_bounds = array<i64: 2>, scalar_prefetch = 0 : i64, scratch_operands = 0 : i64, tpu.core_type = #tpu.core_type<tc>, window_params = [{transform_indices = @transform_0, window_bounds = array<i64: 8, 8>}, {pipeline_mode = #tpu.pipeline_mode<synchronous>, transform_indices = @transform_1, window_bounds = array<i64: 8, 128>}, {pipeline_mode = #tpu.pipeline_mode<synchronous>, transform_indices = @transform_2, window_bounds = array<i64: 1, 128>}, {pipeline_mode = #tpu.pipeline_mode<synchronous>, transform_indices = @transform_3, window_bounds = array<i64: 128, 128>}, {pipeline_mode = #tpu.pipeline_mode<synchronous>, transform_indices = @transform_4, window_bounds = array<i64: 1, 128>}, {pipeline_mode = #tpu.pipeline_mode<synchronous>, transform_indices = @transform_5, window_bounds = array<i64: 128, 128>}, {pipeline_mode = #tpu.pipeline_mode<synchronous>, transform_indices = @transform_6, window_bounds = array<i64: 1, 128>}, {pipeline_mode = #tpu.pipeline_mode<synchronous>, transform_indices = @transform_7, window_bounds = array<i64: 1, 128>}, {pipeline_mode = #tpu.pipeline_mode<synchronous>, transform_indices = @transform_8, window_bounds = array<i64: 1, 128>}, {transform_indices = @transform_9, window_bounds = array<i64: 8, 128>}]} {
    %c0 = arith.constant 0 : index
    %c0_0 = arith.constant 0 : index
    %0 = vector.load %arg1[%c0, %c0_0] : memref<8x8xf32, #tpu.memory_space<vmem>>, vector<8x8xf32>
    %1 = arith.truncf %0 : vector<8x8xf32> to vector<8x8xbf16>
    %c0_1 = arith.constant 0 : index
    %c0_2 = arith.constant 0 : index
    %2 = vector.load %arg2[%c0_1, %c0_2] : memref<8x128xbf16, #tpu.memory_space<vmem>>, vector<8x128xbf16>
    %cst = arith.constant dense<0.000000e+00> : vector<8x128xf32>
    %3 = tpu.matmul %1, %2, %cst {dimension_numbers = #tpu.dot_dimension_numbers<[1], [0], [0], [1], [0, 0, 1, 1], [], []>} : vector<8x8xbf16>, vector<8x128xbf16>, vector<8x128xf32> -> vector<8x128xf32>
    %c0_3 = arith.constant 0 : index
    %c0_4 = arith.constant 0 : index
    %4 = vector.load %arg3[%c0_3, %c0_4] : memref<1x128xf32, #tpu.memory_space<vmem>>, vector<1x128xf32>
    %5 = vector.broadcast %4 : vector<1x128xf32> to vector<8x128xf32>
    %6 = arith.addf %3, %5 : vector<8x128xf32>
    %cst_5 = arith.constant 0.000000e+00 : f32
    %7 = vector.broadcast %cst_5 : f32 to vector<8x128xf32>
    %8 = arith.maximumf %6, %7 : vector<8x128xf32>
    %9 = arith.truncf %8 : vector<8x128xf32> to vector<8x128xbf16>
    %c0_6 = arith.constant 0 : index
    %c0_7 = arith.constant 0 : index
    %10 = vector.load %arg4[%c0_6, %c0_7] : memref<128x128xbf16, #tpu.memory_space<vmem>>, vector<128x128xbf16>
    %cst_8 = arith.constant dense<0.000000e+00> : vector<8x128xf32>
    %11 = tpu.matmul %9, %10, %cst_8 {dimension_numbers = #tpu.dot_dimension_numbers<[1], [0], [0], [1], [0, 0, 1, 1], [], []>} : vector<8x128xbf16>, vector<128x128xbf16>, vector<8x128xf32> -> vector<8x128xf32>
    %c0_9 = arith.constant 0 : index
    %c0_10 = arith.constant 0 : index
    %12 = vector.load %arg5[%c0_9, %c0_10] : memref<1x128xf32, #tpu.memory_space<vmem>>, vector<1x128xf32>
    %13 = vector.broadcast %12 : vector<1x128xf32> to vector<8x128xf32>
    %14 = arith.addf %11, %13 : vector<8x128xf32>
    %cst_11 = arith.constant 0.000000e+00 : f32
    %15 = vector.broadcast %cst_11 : f32 to vector<8x128xf32>
    %16 = arith.maximumf %14, %15 : vector<8x128xf32>
    %17 = arith.truncf %16 : vector<8x128xf32> to vector<8x128xbf16>
    %c0_12 = arith.constant 0 : index
    %c0_13 = arith.constant 0 : index
    %18 = vector.load %arg6[%c0_12, %c0_13] : memref<128x128xbf16, #tpu.memory_space<vmem>>, vector<128x128xbf16>
    %cst_14 = arith.constant dense<0.000000e+00> : vector<8x128xf32>
    %19 = tpu.matmul %17, %18, %cst_14 {dimension_numbers = #tpu.dot_dimension_numbers<[1], [0], [0], [1], [0, 0, 1, 1], [], []>} : vector<8x128xbf16>, vector<128x128xbf16>, vector<8x128xf32> -> vector<8x128xf32>
    %c0_15 = arith.constant 0 : index
    %c0_16 = arith.constant 0 : index
    %20 = vector.load %arg7[%c0_15, %c0_16] : memref<1x128xf32, #tpu.memory_space<vmem>>, vector<1x128xf32>
    %21 = vector.broadcast %20 : vector<1x128xf32> to vector<8x128xf32>
    %22 = arith.addf %19, %21 : vector<8x128xf32>
    %23 = math.tanh %22 : vector<8x128xf32>
    %c0_17 = arith.constant 0 : index
    %c0_18 = arith.constant 0 : index
    %24 = vector.load %arg8[%c0_17, %c0_18] : memref<1x128xf32, #tpu.memory_space<vmem>>, vector<1x128xf32>
    %25 = vector.broadcast %24 : vector<1x128xf32> to vector<8x128xf32>
    %26 = arith.mulf %23, %25 : vector<8x128xf32>
    %c0_19 = arith.constant 0 : index
    %c0_20 = arith.constant 0 : index
    %27 = vector.load %arg9[%c0_19, %c0_20] : memref<1x128xf32, #tpu.memory_space<vmem>>, vector<1x128xf32>
    %28 = vector.broadcast %27 : vector<1x128xf32> to vector<8x128xf32>
    %29 = arith.addf %26, %28 : vector<8x128xf32>
    %c0_21 = arith.constant 0 : index
    %c0_22 = arith.constant 0 : index
    %30 = vector.load %arg10[%c0_21, %c0_22] : memref<8x128xf32, #tpu.memory_space<vmem>>, vector<8x128xf32>
    tpu.vector_store %arg10[%c0_21, %c0_22], %29 {strides = array<i32>} : memref<8x128xf32, #tpu.memory_space<vmem>>, vector<8x128xf32>,
    return
  }
  func.func @transform_0(%arg0: i32) -> (i32, i32) {
    %c0_i32 = arith.constant 0 : i32
    %c0_i32_0 = arith.constant 0 : i32
    return %arg0, %c0_i32 : i32, i32
  }
  func.func @transform_1(%arg0: i32) -> (i32, i32) {
    %c0_i32 = arith.constant 0 : i32
    %c0_i32_0 = arith.constant 0 : i32
    %c0_i32_1 = arith.constant 0 : i32
    return %c0_i32, %c0_i32_0 : i32, i32
  }
  func.func @transform_2(%arg0: i32) -> (i32, i32) {
    %c0_i32 = arith.constant 0 : i32
    %c0_i32_0 = arith.constant 0 : i32
    %c0_i32_1 = arith.constant 0 : i32
    return %c0_i32, %c0_i32_0 : i32, i32
  }
  func.func @transform_3(%arg0: i32) -> (i32, i32) {
    %c0_i32 = arith.constant 0 : i32
    %c0_i32_0 = arith.constant 0 : i32
    %c0_i32_1 = arith.constant 0 : i32
    return %c0_i32, %c0_i32_0 : i32, i32
  }
  func.func @transform_4(%arg0: i32) -> (i32, i32) {
    %c0_i32 = arith.constant 0 : i32
    %c0_i32_0 = arith.constant 0 : i32
    %c0_i32_1 = arith.constant 0 : i32
    return %c0_i32, %c0_i32_0 : i32, i32
  }
  func.func @transform_5(%arg0: i32) -> (i32, i32) {
    %c0_i32 = arith.constant 0 : i32
    %c0_i32_0 = arith.constant 0 : i32
    %c0_i32_1 = arith.constant 0 : i32
    return %c0_i32, %c0_i32_0 : i32, i32
  }
  func.func @transform_6(%arg0: i32) -> (i32, i32) {
    %c0_i32 = arith.constant 0 : i32
    %c0_i32_0 = arith.constant 0 : i32
    %c0_i32_1 = arith.constant 0 : i32
    return %c0_i32, %c0_i32_0 : i32, i32
  }
  func.func @transform_7(%arg0: i32) -> (i32, i32) {
    %c0_i32 = arith.constant 0 : i32
    %c0_i32_0 = arith.constant 0 : i32
    %c0_i32_1 = arith.constant 0 : i32
    return %c0_i32, %c0_i32_0 : i32, i32
  }
  func.func @transform_8(%arg0: i32) -> (i32, i32) {
    %c0_i32 = arith.constant 0 : i32
    %c0_i32_0 = arith.constant 0 : i32
    %c0_i32_1 = arith.constant 0 : i32
    return %c0_i32, %c0_i32_0 : i32, i32
  }
  func.func @transform_9(%arg0: i32) -> (i32, i32) {
    %c0_i32 = arith.constant 0 : i32
    %c0_i32_0 = arith.constant 0 : i32
    return %arg0, %c0_i32 : i32, i32
  }
}

</mosaic_0001>

<llo_original>
// kernel: policy_forward.1
$region0: #{policy_forward.1}
  #allocation0 [shape = 'u32[]', space=smem, size = 0x4, offset = 0x4, fixed_abs, tag = 'smem constant byte address 0x4 - core index']
  #allocation1 [shape = 'u32[144,128]{1,0:T(1,128)}', space=vmem, size = 0x12000, scoped, tag = 'internal scratch']
  %s0 = inlined_call_operand.vmem [shape: f32[16,8], index: 0, kind: input, shape index: {}]
  %s1 = inlined_call_operand.vmem [shape: bf16[8,128], index: 1, kind: input, shape index: {}]
  %s2 = inlined_call_operand.vmem [shape: f32[1,128], index: 2, kind: input, shape index: {}]
  %s3 = inlined_call_operand.hbm [shape: bf16[128,128], index: 3, kind: input, shape index: {}]
  %s4 = inlined_call_operand.vmem [shape: f32[1,128], index: 4, kind: input, shape index: {}]
  %s5 = inlined_call_operand.hbm [shape: bf16[128,128], index: 5, kind: input, shape index: {}]
  %s6 = inlined_call_operand.vmem [shape: f32[1,128], index: 6, kind: input, shape index: {}]
  %s7 = inlined_call_operand.vmem [shape: f32[1,128], index: 7, kind: input, shape index: {}]
  %s8 = inlined_call_operand.vmem [shape: f32[1,128], index: 8, kind: input, shape index: {}]
  %s9 = inlined_call_operand.vmem [shape: f32[16,128], index: 9, kind: output, shape index: {}]
  %s10 = sld [smem:[#allocation0]]
  $region77: #{policy_forward.1} parent=0
    _
  %s12 = ssub.s32 1, %s10
  %s13 = scalar_select 0, %s12, %s10
  $region1: #{policy_forward.1} parent=0
    #allocation2 [shape = 'u8[32768]{0}', space=vmem, size = 0x8000, scoped, tag = 'input window, operand 3, single buffered']
    #allocation3 [shape = 's32[2]{0}', space=sflag, size = 0x8, scoped, tag = 'scoped memory for policy_forward.1']
    #allocation4 [shape = 'u8[32768]{0}', space=vmem, size = 0x8000, scoped, tag = 'input window, operand 5, single buffered']
    #allocation5 [shape = 's32[1]{0}', space=sflag, size = 0x4, scoped, tag = 'scoped memory for policy_forward.1']
    %14 = vsyncpa [#allocation3], 0
    %15 = vsyncpa [#allocation5], 0
    loop: start=0, step=1, limit=4
    $region2: #{policy_forward.1} parent=1 // loop_pre_header
      _
    $region3: #{policy_forward.1} parent=1 // loop_header
      %s17 = sphi 0, %s21
      %p18 = scmp.ge.s32.totalorder %s17, 4
      %s27 = sphi 0, %s29
      %s30 = sphi 0, %s27
      %s31 = sphi 0, %s30
      %s47 = sphi 0, %s31
      %s51 = sphi 0, %s51
      %s53 = sphi 0, %s51
      %s54 = sphi 0, %s53
      %s68 = sphi 0, %s54
      %s72 = sphi 0, %s72
      %s74 = sphi 0, %s72
      %s75 = sphi 0, %s74
      %s89 = sphi 0, %s75
      %s93 = sphi 0, %s93
      %s95 = sphi 0, %s93
      %s96 = sphi 0, %s95
      %s110 = sphi 0, %s96
      %s114 = sphi 0, %s114
      %s116 = sphi 0, %s114
      %s117 = sphi 0, %s116
      %s131 = sphi 0, %s117
      %s135 = sphi 0, %s135
      %s137 = sphi 0, %s135
      %s138 = sphi 0, %s137
      %s152 = sphi 0, %s138
      %s156 = sphi 0, %s156
      %s158 = sphi 0, %s156
      %s159 = sphi 0, %s158
      %s173 = sphi 0, %s159
      %s177 = sphi 0, %s177
      %s179 = sphi 0, %s177
      %s180 = sphi 0, %s179
      %s194 = sphi 0, %s180
      %s198 = sphi 0, %s198
      %s200 = sphi 0, %s198
      %s201 = sphi 0, %s200
      %s215 = sphi 0, %s201
      %s221 = sphi 0, %s223
      %s224 = sphi 0, %s221
      %s225 = sphi 0, %s224
      %s241 = sphi 0, %s225
    $region4: #{policy_forward.1} parent=1 // loop_header_branch
      %20 = sbr.rel (%p18) target = $region8
    $region5: #{policy_forward.1} parent=1 // loop_body
      %s22 = ssub.s32 %s17, 1
      %s23 = ssub.s32 %s17, 2
      %s24 = sadd.s32 %s17, 1
      %s25 = ssub.s32 %s17, %s24
      %p26 = scmp.eq.s32.totalorder %s25, 0
      %s28 = sadd.s32 %s27, 1
      %s29 = scalar_select %p26, %s27, %s28
      %p32 = pneg %p26
      %p33 = scmp.eq.s32.totalorder %s17, 1
      %p34 = por %p32, %p33
      %p35 = scmp.ne.s32.totalorder %s27, %s30
      %p36 = scmp.eq.s32.totalorder %s17, 0
      %p37 = por %p35, %p36
      %p38 = scmp.ne.s32.totalorder %s27, %s30
      %p39 = scmp.eq.s32.totalorder %s22, 1
      %p40 = por %p38, %p39
      %p41 = scmp.ne.s32.totalorder %s30, %s31
      %p42 = scmp.eq.s32.totalorder %s22, 0
      %p43 = por %p41, %p42
      %p44 = scmp.ne.s32.totalorder %s30, %s31
      %p45 = scmp.eq.s32.totalorder %s23, 1
      %p46 = por %p44, %p45
      %p48 = scmp.ne.s32.totalorder %s31, %s47
      %p49 = scmp.eq.s32.totalorder %s23, 0
      %p50 = por %p48, %p49
      %s52 = sadd.s32 %s51, 1
      %p55 = scmp.eq.s32.totalorder %s17, 1
      %p56 = scmp.ne.s32.totalorder %s51, %s53
      %p57 = scmp.eq.s32.totalorder %s17, 0
      %p58 = por %p56, %p57
      %p59 = scmp.ne.s32.totalorder %s51, %s53
      %p60 = scmp.eq.s32.totalorder %s22, 1
      %p61 = por %p59, %p60
      %p62 = scmp.ne.s32.totalorder %s53, %s54
      %p63 = scmp.eq.s32.totalorder %s22, 0
      %p64 = por %p62, %p63
      %p65 = scmp.ne.s32.totalorder %s53, %s54
      %p66 = scmp.eq.s32.totalorder %s23, 1
      %p67 = por %p65, %p66
      %p69 = scmp.ne.s32.totalorder %s54, %s68
      %p70 = scmp.eq.s32.totalorder %s23, 0
      %p71 = por %p69, %p70
      %s73 = sadd.s32 %s72, 1
      %p76 = scmp.eq.s32.totalorder %s17, 1
      %p77 = scmp.ne.s32.totalorder %s72, %s74
      %p78 = scmp.eq.s32.totalorder %s17, 0
      %p79 = por %p77, %p78
      %p80 = scmp.ne.s32.totalorder %s72, %s74
      %p81 = scmp.eq.s32.totalorder %s22, 1
      %p82 = por %p80, %p81
      %p83 = scmp.ne.s32.totalorder %s74, %s75
      %p84 = scmp.eq.s32.totalorder %s22, 0
      %p85 = por %p83, %p84
      %p86 = scmp.ne.s32.totalorder %s74, %s75
      %p87 = scmp.eq.s32.totalorder %s23, 1
      %p88 = por %p86, %p87
      %p90 = scmp.ne.s32.totalorder %s75, %s89
      %p91 = scmp.eq.s32.totalorder %s23, 0
      %p92 = por %p90, %p91
      %s94 = sadd.s32 %s93, 1
      %p97 = scmp.eq.s32.totalorder %s17, 1
      %p98 = scmp.ne.s32.totalorder %s93, %s95
      %p99 = scmp.eq.s32.totalorder %s17, 0
      %p100 = por %p98, %p99
      %p101 = scmp.ne.s32.totalorder %s93, %s95
      %p102 = scmp.eq.s32.totalorder %s22, 1
      %p103 = por %p101, %p102
      %p104 = scmp.ne.s32.totalorder %s95, %s96
      %p105 = scmp.eq.s32.totalorder %s22, 0
      %p106 = por %p104, %p105
      %p107 = scmp.ne.s32.totalorder %s95, %s96
      %p108 = scmp.eq.s32.totalorder %s23, 1
      %p109 = por %p107, %p108
      %p111 = scmp.ne.s32.totalorder %s96, %s110
      %p112 = scmp.eq.s32.totalorder %s23, 0
      %p113 = por %p111, %p112
      %s115 = sadd.s32 %s114, 1
      %p118 = scmp.eq.s32.totalorder %s17, 1
      %p119 = scmp.ne.s32.totalorder %s114, %s116
      %p120 = scmp.eq.s32.totalorder %s17, 0
      %p121 = por %p119, %p120
      %p122 = scmp.ne.s32.totalorder %s114, %s116
      %p123 = scmp.eq.s32.totalorder %s22, 1
      %p124 = por %p122, %p123
      %p125 = scmp.ne.s32.totalorder %s116, %s117
      %p126 = scmp.eq.s32.totalorder %s22, 0
      %p127 = por %p125, %p126
      %p128 = scmp.ne.s32.totalorder %s116, %s117
      %p129 = scmp.eq.s32.totalorder %s23, 1
      %p130 = por %p128, %p129
      %p132 = scmp.ne.s32.totalorder %s117, %s131
      %p133 = scmp.eq.s32.totalorder %s23, 0
      %p134 = por %p132, %p133
      %s136 = sadd.s32 %s135, 1
      %p139 = scmp.eq.s32.totalorder %s17, 1
      %p140 = scmp.ne.s32.totalorder %s135, %s137
      %p141 = scmp.eq.s32.totalorder %s17, 0
      %p142 = por %p140, %p141
      %p143 = scmp.ne.s32.totalorder %s135, %s137
      %p144 = scmp.eq.s32.totalorder %s22, 1
      %p145 = por %p143, %p144
      %p146 = scmp.ne.s32.totalorder %s137, %s138
      %p147 = scmp.eq.s32.totalorder %s22, 0
      %p148 = por %p146, %p147
      %p149 = scmp.ne.s32.totalorder %s137, %s138
      %p150 = scmp.eq.s32.totalorder %s23, 1
      %p151 = por %p149, %p150
      %p153 = scmp.ne.s32.totalorder %s138, %s152
      %p154 = scmp.eq.s32.totalorder %s23, 0
      %p155 = por %p153, %p154
      %s157 = sadd.s32 %s156, 1
      %p160 = scmp.eq.s32.totalorder %s17, 1
      %p161 = scmp.ne.s32.totalorder %s156, %s158
      %p162 = scmp.eq.s32.totalorder %s17, 0
      %p163 = por %p161, %p162
      %p164 = scmp.ne.s32.totalorder %s156, %s158
      %p165 = scmp.eq.s32.totalorder %s22, 1
      %p166 = por %p164, %p165
      %p167 = scmp.ne.s32.totalorder %s158, %s159
      %p168 = scmp.eq.s32.totalorder %s22, 0
      %p169 = por %p167, %p168
      %p170 = scmp.ne.s32.totalorder %s158, %s159
      %p171 = scmp.eq.s32.totalorder %s23, 1
      %p172 = por %p170, %p171
      %p174 = scmp.ne.s32.totalorder %s159, %s173
      %p175 = scmp.eq.s32.totalorder %s23, 0
      %p176 = por %p174, %p175
      %s178 = sadd.s32 %s177, 1
      %p181 = scmp.eq.s32.totalorder %s17, 1
      %p182 = scmp.ne.s32.totalorder %s177, %s179
      %p183 = scmp.eq.s32.totalorder %s17, 0
      %p184 = por %p182, %p183
      %p185 = scmp.ne.s32.totalorder %s177, %s179
      %p186 = scmp.eq.s32.totalorder %s22, 1
      %p187 = por %p185, %p186
      %p188 = scmp.ne.s32.totalorder %s179, %s180
      %p189 = scmp.eq.s32.totalorder %s22, 0
      %p190 = por %p188, %p189
      %p191 = scmp.ne.s32.totalorder %s179, %s180
      %p192 = scmp.eq.s32.totalorder %s23, 1
      %p193 = por %p191, %p192
      %p195 = scmp.ne.s32.totalorder %s180, %s194
      %p196 = scmp.eq.s32.totalorder %s23, 0
      %p197 = por %p195, %p196
      %s199 = sadd.s32 %s198, 1
      %p202 = scmp.eq.s32.totalorder %s17, 1
      %p203 = scmp.ne.s32.totalorder %s198, %s200
      %p204 = scmp.eq.s32.totalorder %s17, 0
      %p205 = por %p203, %p204
      %p206 = scmp.ne.s32.totalorder %s198, %s200
      %p207 = scmp.eq.s32.totalorder %s22, 1
      %p208 = por %p206, %p207
      %p209 = scmp.ne.s32.totalorder %s200, %s201
      %p210 = scmp.eq.s32.totalorder %s22, 0
      %p211 = por %p209, %p210
      %p212 = scmp.ne.s32.totalorder %s200, %s201
      %p213 = scmp.eq.s32.totalorder %s23, 1
      %p214 = por %p212, %p213
      %p216 = scmp.ne.s32.totalorder %s201, %s215
      %p217 = scmp.eq.s32.totalorder %s23, 0
      %p218 = por %p216, %p217
      %s219 = ssub.s32 %s17, %s24
      %p220 = scmp.eq.s32.totalorder %s219, 0
      %s222 = sadd.s32 %s221, 1
      %s223 = scalar_select %p220, %s221, %s222
      %p226 = pneg %p220
      %p227 = scmp.eq.s32.totalorder %s17, 1
      %p228 = por %p226, %p227
      %p229 = scmp.ne.s32.totalorder %s221, %s224
      %p230 = scmp.eq.s32.totalorder %s17, 0
      %p231 = por %p229, %p230
      %p232 = scmp.ne.s32.totalorder %s221, %s224
      %p233 = scmp.eq.s32.totalorder %s22, 1
      %p234 = por %p232, %p233
      %p235 = scmp.ne.s32.totalorder %s224, %s225
      %p236 = scmp.eq.s32.totalorder %s22, 0
      %p237 = por %p235, %p236
      %p238 = scmp.ne.s32.totalorder %s224, %s225
      %p239 = scmp.eq.s32.totalorder %s23, 1
      %p240 = por %p238, %p239
      %p242 = scmp.ne.s32.totalorder %s225, %s241
      %p243 = scmp.eq.s32.totalorder %s23, 0
      %p244 = por %p242, %p243
      %p245 = scmp.le.s32.totalorder 1, %s17
      %p246 = scmp.lt.s32.totalorder %s17, 3
      %p247 = pnand %p245, %p246
      %p248 = pneg %p247
      // Predicated region
      $region9: #{policy_forward.1} parent=5 // pred_check
        _
      $region10: #{policy_forward.1} parent=5 // pred_check_branch
        %250 = sbr.rel (%p247) target = $region12
      $region11: #{policy_forward.1} parent=5 // pred_region
        %s251 = ssub.s32 %s17, 1
        // Predicated region
        $region13: #{policy_forward.1} parent=11 // pred_check
          %p252 = pneg %p64
        $region14: #{policy_forward.1} parent=11 // pred_check_branch
          %254 = sbr.rel (%p252) target = $region16
        $region15: #{policy_forward.1} parent=11 // pred_region
          _
        $region16: #{policy_forward.1} parent=11 // pred_fallthru
          _
        // Predicated region
        $region17: #{policy_forward.1} parent=11 // pred_check
          %p255 = pneg %p85
        $region18: #{policy_forward.1} parent=11 // pred_check_branch
          %257 = sbr.rel (%p255) target = $region20
        $region19: #{policy_forward.1} parent=11 // pred_region
          _
        $region20: #{policy_forward.1} parent=11 // pred_fallthru
          _
        // Predicated region
        $region21: #{policy_forward.1} parent=11 // pred_check
          %p258 = pneg %p106
        $region22: #{policy_forward.1} parent=11 // pred_check_branch
          %260 = sbr.rel (%p258) target = $region24
        $region23: #{policy_forward.1} parent=11 // pred_region
          %s262 = ssub.s32 1024, 1024
          %263 = vsyncadd [#allocation3], %s262
          %s264 = sshll.u32 [#allocation2], 4
          %s265 = int_to_ptr.vmem [resolvable:$true] %s264
          %270 = dma.hbm_to_vmem [thread:$0]  %s3, 1024, %s265, [#allocation3], 64, 64, 4
        $region24: #{policy_forward.1} parent=11 // pred_fallthru
          _
        // Predicated region
        $region25: #{policy_forward.1} parent=11 // pred_check
          %p271 = pneg %p127
        $region26: #{policy_forward.1} parent=11 // pred_check_branch
          %273 = sbr.rel (%p271) target = $region28
        $region27: #{policy_forward.1} parent=11 // pred_region
          _
        $region28: #{policy_forward.1} parent=11 // pred_fallthru
          _
        // Predicated region
        $region29: #{policy_forward.1} parent=11 // pred_check
          %p274 = pneg %p148
        $region30: #{policy_forward.1} parent=11 // pred_check_branch
          %276 = sbr.rel (%p274) target = $region32
        $region31: #{policy_forward.1} parent=11 // pred_region
          %s278 = ssub.s32 1024, 1024
          %279 = vsyncadd [#allocation5], %s278
          %s280 = sshll.u32 [#allocation4], 4
          %s281 = int_to_ptr.vmem [resolvable:$true] %s280
          %286 = dma.hbm_to_vmem [thread:$0]  %s5, 1024, %s281, [#allocation5], 64, 64, 4
        $region32: #{policy_forward.1} parent=11 // pred_fallthru
          _
        // Predicated region
        $region33: #{policy_forward.1} parent=11 // pred_check
          %p287 = pneg %p169
        $region34: #{policy_forward.1} parent=11 // pred_check_branch
          %289 = sbr.rel (%p287) target = $region36
        $region35: #{policy_forward.1} parent=11 // pred_region
          _
        $region36: #{policy_forward.1} parent=11 // pred_fallthru
          _
        // Predicated region
        $region37: #{policy_forward.1} parent=11 // pred_check
          %p290 = pneg %p190
        $region38: #{policy_forward.1} parent=11 // pred_check_branch
          %292 = sbr.rel (%p290) target = $region40
        $region39: #{policy_forward.1} parent=11 // pred_region
          _
        $region40: #{policy_forward.1} parent=11 // pred_fallthru
          _
        // Predicated region
        $region41: #{policy_forward.1} parent=11 // pred_check
          %p293 = pneg %p211
        $region42: #{policy_forward.1} parent=11 // pred_check_branch
          %295 = sbr.rel (%p293) target = $region44
        $region43: #{policy_forward.1} parent=11 // pred_region
          _
        $region44: #{policy_forward.1} parent=11 // pred_fallthru
          _
      $region12: #{policy_forward.1} parent=5 // pred_fallthru
        _
      %p296 = scmp.lt.s32.totalorder %s17, 2
      // Predicated region
      $region45: #{policy_forward.1} parent=5 // pred_check
        %p297 = pneg %p296
      $region46: #{policy_forward.1} parent=5 // pred_check_branch
        %299 = sbr.rel (%p297) target = $region48
      $region47: #{policy_forward.1} parent=5 // pred_region
        // Predicated region
        $region49: #{policy_forward.1} parent=47 // pred_check
          %p300 = pneg %p37
        $region50: #{policy_forward.1} parent=47 // pred_check_branch
          %302 = sbr.rel (%p300) target = $region52
        $region51: #{policy_forward.1} parent=47 // pred_region
          %p303 = scmp.lt.s32.totalorder %s17, 1
          %s304 = scalar_select %p303, %s17, 1
          %s305 = smul.addr %s304, 8
          %s306 = scalar_lea.vmem %s0, %s305
        $region52: #{policy_forward.1} parent=47 // pred_fallthru
          _
      $region48: #{policy_forward.1} parent=5 // pred_fallthru
        _
      %p307 = scmp.le.s32.totalorder 1, %s17
      %p308 = scmp.lt.s32.totalorder %s17, 3
      %p309 = pnand %p307, %p308
      %p310 = pneg %p309
      // Predicated region
      $region53: #{policy_forward.1} parent=5 // pred_check
        _
      $region54: #{policy_forward.1} parent=5 // pred_check_branch
        %312 = sbr.rel (%p309) target = $region56
      $region55: #{policy_forward.1} parent=5 // pred_region
        %s313 = ssub.s32 %s17, 1
        // Predicated region
        $region57: #{policy_forward.1} parent=55 // pred_check
          %p314 = pneg %p106
        $region58: #{policy_forward.1} parent=55 // pred_check_branch
          %316 = sbr.rel (%p314) target = $region60
        $region59: #{policy_forward.1} parent=55 // pred_region
          %317 = dma.done [#allocation3], 1024
        $region60: #{policy_forward.1} parent=55 // pred_fallthru
          _
        // Predicated region
        $region61: #{policy_forward.1} parent=55 // pred_check
          %p318 = pneg %p148
        $region62: #{policy_forward.1} parent=55 // pred_check_branch
          %320 = sbr.rel (%p318) target = $region64
        $region63: #{policy_forward.1} parent=55 // pred_region
          %321 = dma.done [#allocation5], 1024
        $region64: #{policy_forward.1} parent=55 // pred_fallthru
          _
        %p322 = scmp.lt.s32.totalorder %s22, 1
        %s323 = scalar_select %p322, %s22, 1
        %s324 = smul.addr %s323, 8
        %s325 = scalar_lea.vmem %s0, %s324
        %p326 = pneg %p43
        %p327 = pneg %p40
        %p328 = pneg %p64
        %p329 = pneg %p61
        %p330 = pneg %p85
        %p331 = pneg %p82
        %p332 = pneg %p106
        %p333 = pneg %p103
        %p334 = pneg %p127
        %p335 = pneg %p124
        %p336 = pneg %p148
        %p337 = pneg %p145
        %p338 = pneg %p169
        %p339 = pneg %p166
        %p340 = pneg %p190
        %p341 = pneg %p187
        %p342 = pneg %p211
        %p343 = pneg %p208
        %p344 = pneg %p237
        %p345 = pneg %p234
        %p346 = scmp.lt.s32.totalorder %s22, 1
        %s347 = scalar_select %p346, %s22, 1
        %s348 = smul.addr %s347, 8
        %s349 = scalar_lea.vmem %s9, %s348
        %p350 = scmp.lt.s32.totalorder %s22, 1
        %s351 = scalar_select %p350, %s22, 1
        %s352 = smul.addr %s351, 8
        %s353 = scalar_lea.vmem %s0, %s352
        %p354 = scmp.lt.s32.totalorder %s22, 1
        %s355 = scalar_select %p354, %s22, 1
        %s356 = smul.addr %s355, 8
        %s357 = scalar_lea.vmem %s9, %s356
        %v359 = vld [vmem:[%s353] sm:$0xff]
        %v360 = vpack.c.bf16 %v359, %v359
        %v361 = vld [vmem:[%s1] sm:$0xf]
        %v362 = vld [vmem:[%s2] sm:$0x1]
        %v364 = vlaneseq
        %v365 = vshrl.u32 %v364, 7
        %v366 = vsub.s32 0, %v365
        %v367 = vrot.slane %v362, %v366
        %vm369 = vcmask 64512
        %v371 = vsel %vm369, %v360, 0
        %vm373 = vcmask 1043456
        %v375 = vsel %vm373, %v361, 0
        %377 = vmatprep.subr.bf16.mxu0 0
        %378 = vmatpush1.bf16.msra.mxu0 %v375
        %379 = vmatprep.subr.bf16.mxu0 0
        %380 = vmatpush1.bf16.msra.mxu0 0
        %381 = vmatprep.subr.bf16.mxu0 0
        %382 = vmatpush1.bf16.msra.mxu0 0
        %383 = vmatprep.subr.bf16.mxu0 0
        %384 = vmatpush1.bf16.msra.mxu0 0
        %385 = vmatprep.subr.bf16.mxu0 0
        %386 = vmatpush1.bf16.msra.mxu0 0
        %387 = vmatprep.subr.bf16.mxu0 0
        %388 = vmatpush1.bf16.msra.mxu0 0
        %389 = vmatprep.subr.bf16.mxu0 0
        %390 = vmatpush1.bf16.msra.mxu0 0
        %391 = vmatprep.subr.bf16.mxu0 0
        %392 = vmatpush1.bf16.msra.mxu0 0
        %393 = vmatprep.subr.bf16.mxu0 0
        %394 = vmatpush1.bf16.msra.mxu0 0
        %395 = vmatprep.subr.bf16.mxu0 0
        %396 = vmatpush1.bf16.msra.mxu0 0
        %397 = vmatprep.subr.bf16.mxu0 0
        %398 = vmatpush1.bf16.msra.mxu0 0
        %399 = vmatprep.subr.bf16.mxu0 0
        %400 = vmatpush1.bf16.msra.mxu0 0
        %401 = vmatprep.subr.bf16.mxu0 0
        %402 = vmatpush1.bf16.msra.mxu0 0
        %403 = vmatprep.subr.bf16.mxu0 0
        %404 = vmatpush1.bf16.msra.mxu0 0
        %405 = vmatprep.subr.bf16.mxu0 0
        %406 = vmatpush1.bf16.msra.mxu0 0
        %407 = vmatprep.subr.bf16.mxu0 0
        %408 = vmatpush1.bf16.msra.mxu0 0
        %409 = vmatprep.mubr.bf16.mxu0 0
        %410 = vmatmul.mubr.bf16.gmra.mrb[0].mxu0 %v371
        %v411 = vpop.f32.mrb[0].mxu0
        %v412 = vadd.f32 %v367, %v411
        %v413 = vpop.f32.mrb[0].mxu0
        %v414 = vpop.f32.mrb[0].mxu0
        %v415 = vpop.f32.mrb[0].mxu0
        %416 = vdwg.mxu0
        %v417 = vmax.f32 %v412, 0.0
        %v418 = vpack.c.bf16 %v417, %v417
        %v419 = vld [vmem:[#allocation2] sm:$0xf]
        %v420 = vld [vmem:[#allocation2 + $0x4] sm:$0xf]
        %v421 = vld [vmem:[#allocation2 + $0x8] sm:$0xf]
        %v422 = vld [vmem:[#allocation2 + $0xc] sm:$0xf]
        %v423 = vld [vmem:[#allocation2 + $0x10] sm:$0xf]
        %v424 = vld [vmem:[#allocation2 + $0x14] sm:$0xf]
        %v425 = vld [vmem:[#allocation2 + $0x18] sm:$0xf]
        %v426 = vld [vmem:[#allocation2 + $0x1c] sm:$0xf]
        %v427 = vld [vmem:[#allocation2 + $0x20] sm:$0xf]
        %v428 = vld [vmem:[#allocation2 + $0x24] sm:$0xf]
        %v429 = vld [vmem:[#allocation2 + $0x28] sm:$0xf]
        %v430 = vld [vmem:[#allocation2 + $0x2c] sm:$0xf]
        %v431 = vld [vmem:[#allocation2 + $0x30] sm:$0xf]
        %v432 = vld [vmem:[#allocation2 + $0x34] sm:$0xf]
        %v433 = vld [vmem:[#allocation2 + $0x38] sm:$0xf]
        %v434 = vld [vmem:[#allocation2 + $0x3c] sm:$0xf]
        %v435 = vld [vmem:[%s4] sm:$0x1]
        %v437 = vlaneseq
        %v438 = vshrl.u32 %v437, 7
        %v439 = vsub.s32 0, %v438
        %v440 = vrot.slane %v435, %v439
        %v458 = vunpack.c.l.b16 %v419
        %v459 = vunpack.c.l.b16 %v420
        %v460 = vunpack.c.l.b16 %v421
        %v461 = vunpack.c.l.b16 %v422
        %v462 = vunpack.c.l.b16 %v423
        %v463 = vunpack.c.l.b16 %v424
        %v464 = vunpack.c.l.b16 %v425
        %v465 = vunpack.c.l.b16 %v426
        %v466 = vunpack.c.l.b16 %v427
        %v467 = vunpack.c.l.b16 %v428
        %v468 = vunpack.c.l.b16 %v429
        %v469 = vunpack.c.l.b16 %v430
        %v470 = vunpack.c.l.b16 %v431
        %v471 = vunpack.c.l.b16 %v432
        %v472 = vunpack.c.l.b16 %v433
        %v473 = vunpack.c.l.b16 %v434
        %v474 = vpack.c.b16 %v459, %v458
        %v475 = vpack.c.b16 %v461, %v460
        %v476 = vpack.c.b16 %v463, %v462
        %v477 = vpack.c.b16 %v465, %v464
        %v478 = vpack.c.b16 %v467, %v466
        %v479 = vpack.c.b16 %v469, %v468
        %v480 = vpack.c.b16 %v471, %v470
        %v481 = vpack.c.b16 %v473, %v472
        %490 = vmatprep.subr.bf16.mxu0 0
        %491 = vmatpush1.bf16.msra.mxu0 %v474
        %492 = vmatprep.subr.bf16.mxu0 0
        %493 = vmatpush1.bf16.msra.mxu0 %v475
        %494 = vmatprep.subr.bf16.mxu0 0
        %495 = vmatpush1.bf16.msra.mxu0 %v476
        %496 = vmatprep.subr.bf16.mxu0 0
        %497 = vmatpush1.bf16.msra.mxu0 %v477
        %498 = vmatprep.subr.bf16.mxu0 0
        %499 = vmatpush1.bf16.msra.mxu0 %v478
        %500 = vmatprep.subr.bf16.mxu0 0
        %501 = vmatpush1.bf16.msra.mxu0 %v479
        %502 = vmatprep.subr.bf16.mxu0 0
        %503 = vmatpush1.bf16.msra.mxu0 %v480
        %504 = vmatprep.subr.bf16.mxu0 0
        %505 = vmatpush1.bf16.msra.mxu0 %v481
        %506 = vmatprep.subr.bf16.mxu0 0
        %507 = vmatpush1.bf16.msra.mxu0 0
        %508 = vmatprep.subr.bf16.mxu0 0
        %509 = vmatpush1.bf16.msra.mxu0 0
        %510 = vmatprep.subr.bf16.mxu0 0
        %511 = vmatpush1.bf16.msra.mxu0 0
        %512 = vmatprep.subr.bf16.mxu0 0
        %513 = vmatpush1.bf16.msra.mxu0 0
        %514 = vmatprep.subr.bf16.mxu0 0
        %515 = vmatpush1.bf16.msra.mxu0 0
        %516 = vmatprep.subr.bf16.mxu0 0
        %517 = vmatpush1.bf16.msra.mxu0 0
        %518 = vmatprep.subr.bf16.mxu0 0
        %519 = vmatpush1.bf16.msra.mxu0 0
        %520 = vmatprep.subr.bf16.mxu0 0
        %521 = vmatpush1.bf16.msra.mxu0 0
        %522 = vmatprep.mubr.bf16.mxu0 0
        %523 = vmatmul.mubr.bf16.gmra.mrb[0].mxu0 %v418
        %v524 = vpop.f32.mrb[0].mxu0
        %v525 = vadd.f32 %v440, %v524
        %v526 = vpop.f32.mrb[0].mxu0
        %v527 = vpop.f32.mrb[0].mxu0
        %v528 = vpop.f32.mrb[0].mxu0
        %529 = vdwg.mxu0
        %v530 = vmax.f32 %v525, 0.0
        %v531 = vpack.c.bf16 %v530, %v530
        %v532 = vld [vmem:[#allocation4] sm:$0xf]
        %v533 = vld [vmem:[#allocation4 + $0x4] sm:$0xf]
        %v534 = vld [vmem:[#allocation4 + $0x8] sm:$0xf]
        %v535 = vld [vmem:[#allocation4 + $0xc] sm:$0xf]
        %v536 = vld [vmem:[#allocation4 + $0x10] sm:$0xf]
        %v537 = vld [vmem:[#allocation4 + $0x14] sm:$0xf]
        %v538 = vld [vmem:[#allocation4 + $0x18] sm:$0xf]
        %v539 = vld [vmem:[#allocation4 + $0x1c] sm:$0xf]
        %v540 = vld [vmem:[#allocation4 + $0x20] sm:$0xf]
        %v541 = vld [vmem:[#allocation4 + $0x24] sm:$0xf]
        %v542 = vld [vmem:[#allocation4 + $0x28] sm:$0xf]
        %v543 = vld [vmem:[#allocation4 + $0x2c] sm:$0xf]
        %v544 = vld [vmem:[#allocation4 + $0x30] sm:$0xf]
        %v545 = vld [vmem:[#allocation4 + $0x34] sm:$0xf]
        %v546 = vld [vmem:[#allocation4 + $0x38] sm:$0xf]
        %v547 = vld [vmem:[#allocation4 + $0x3c] sm:$0xf]
        %v548 = vld [vmem:[%s6] sm:$0x1]
        %v550 = vlaneseq
        %v551 = vshrl.u32 %v550, 7
        %v552 = vsub.s32 0, %v551
        %v553 = vrot.slane %v548, %v552
        %v571 = vunpack.c.l.b16 %v532
        %v572 = vunpack.c.l.b16 %v533
        %v573 = vunpack.c.l.b16 %v534
        %v574 = vunpack.c.l.b16 %v535
        %v575 = vunpack.c.l.b16 %v536
        %v576 = vunpack.c.l.b16 %v537
        %v577 = vunpack.c.l.b16 %v538
        %v578 = vunpack.c.l.b16 %v539
        %v579 = vunpack.c.l.b16 %v540
        %v580 = vunpack.c.l.b16 %v541
        %v581 = vunpack.c.l.b16 %v542
        %v582 = vunpack.c.l.b16 %v543
        %v583 = vunpack.c.l.b16 %v544
        %v584 = vunpack.c.l.b16 %v545
        %v585 = vunpack.c.l.b16 %v546
        %v586 = vunpack.c.l.b16 %v547
        %v587 = vpack.c.b16 %v572, %v571
        %v588 = vpack.c.b16 %v574, %v573
        %v589 = vpack.c.b16 %v576, %v575
        %v590 = vpack.c.b16 %v578, %v577
        %v591 = vpack.c.b16 %v580, %v579
        %v592 = vpack.c.b16 %v582, %v581
        %v593 = vpack.c.b16 %v584, %v583
        %v594 = vpack.c.b16 %v586, %v585
        %603 = vmatprep.subr.bf16.mxu0 0
        %604 = vmatpush1.bf16.msra.mxu0 %v587
        %605 = vmatprep.subr.bf16.mxu0 0
        %606 = vmatpush1.bf16.msra.mxu0 %v588
        %607 = vmatprep.subr.bf16.mxu0 0
        %608 = vmatpush1.bf16.msra.mxu0 %v589
        %609 = vmatprep.subr.bf16.mxu0 0
        %610 = vmatpush1.bf16.msra.mxu0 %v590
        %611 = vmatprep.subr.bf16.mxu0 0
        %612 = vmatpush1.bf16.msra.mxu0 %v591
        %613 = vmatprep.subr.bf16.mxu0 0
        %614 = vmatpush1.bf16.msra.mxu0 %v592
        %615 = vmatprep.subr.bf16.mxu0 0
        %616 = vmatpush1.bf16.msra.mxu0 %v593
        %617 = vmatprep.subr.bf16.mxu0 0
        %618 = vmatpush1.bf16.msra.mxu0 %v594
        %619 = vmatprep.subr.bf16.mxu0 0
        %620 = vmatpush1.bf16.msra.mxu0 0
        %621 = vmatprep.subr.bf16.mxu0 0
        %622 = vmatpush1.bf16.msra.mxu0 0
        %623 = vmatprep.subr.bf16.mxu0 0
        %624 = vmatpush1.bf16.msra.mxu0 0
        %625 = vmatprep.subr.bf16.mxu0 0
        %626 = vmatpush1.bf16.msra.mxu0 0
        %627 = vmatprep.subr.bf16.mxu0 0
        %628 = vmatpush1.bf16.msra.mxu0 0
        %629 = vmatprep.subr.bf16.mxu0 0
        %630 = vmatpush1.bf16.msra.mxu0 0
        %631 = vmatprep.subr.bf16.mxu0 0
        %632 = vmatpush1.bf16.msra.mxu0 0
        %633 = vmatprep.subr.bf16.mxu0 0
        %634 = vmatpush1.bf16.msra.mxu0 0
        %635 = vmatprep.mubr.bf16.mxu0 0
        %636 = vmatmul.mubr.bf16.gmra.mrb[0].mxu0 %v531
        %v637 = vpop.f32.mrb[0].mxu0
        %v638 = vadd.f32 %v553, %v637
        %v639 = vpop.f32.mrb[0].mxu0
        %v640 = vpop.f32.mrb[0].mxu0
        %v641 = vpop.f32.mrb[0].mxu0
        %642 = vdwg.mxu0
        %v643 = vtanh.pop %v638
        %v644 = vld [vmem:[%s7] sm:$0x1]
        %v646 = vlaneseq
        %v647 = vshrl.u32 %v646, 7
        %v648 = vsub.s32 0, %v647
        %v649 = vrot.slane %v644, %v648
        %v651 = vmul.f32 %v643, %v649
        %v652 = vld [vmem:[%s8] sm:$0x1]
        %v654 = vlaneseq
        %v655 = vshrl.u32 %v654, 7
        %v656 = vsub.s32 0, %v655
        %v657 = vrot.slane %v652, %v656
        %v659 = vadd.f32 %v651, %v657
        %660 = vst [vmem:[%s357] sm:$0xff] %v659
        %p661 = scmp.lt.s32.totalorder %s22, 1
        %s662 = scalar_select %p661, %s22, 1
        %s663 = smul.addr %s662, 8
        %s664 = scalar_lea.vmem %s9, %s663
        // Predicated region
        $region65: #{policy_forward.1} parent=55 // pred_check
          %p665 = pneg %p234
        $region66: #{policy_forward.1} parent=55 // pred_check_branch
          %667 = sbr.rel (%p665) target = $region68
        $region67: #{policy_forward.1} parent=55 // pred_region
          _
        $region68: #{policy_forward.1} parent=55 // pred_fallthru
          _
      $region56: #{policy_forward.1} parent=5 // pred_fallthru
        _
      %p668 = scmp.le.s32.totalorder 2, %s17
      // Predicated region
      $region69: #{policy_forward.1} parent=5 // pred_check
        %p669 = pneg %p668
      $region70: #{policy_forward.1} parent=5 // pred_check_branch
        %671 = sbr.rel (%p669) target = $region72
      $region71: #{policy_forward.1} parent=5 // pred_region
        %s672 = ssub.s32 %s17, 2
        // Predicated region
        $region73: #{policy_forward.1} parent=71 // pred_check
          %p673 = pneg %p240
        $region74: #{policy_forward.1} parent=71 // pred_check_branch
          %675 = sbr.rel (%p673) target = $region76
        $region75: #{policy_forward.1} parent=71 // pred_region
          %p676 = scmp.lt.s32.totalorder %s23, 1
          %s677 = scalar_select %p676, %s23, 1
          %s678 = smul.addr %s677, 8
          %s679 = scalar_lea.vmem %s9, %s678
        $region76: #{policy_forward.1} parent=71 // pred_fallthru
          _
      $region72: #{policy_forward.1} parent=5 // pred_fallthru
        _
    $region6: #{policy_forward.1} parent=1 // loop_footer
      %s21 = sadd.s32 1, %s17
    $region7: #{policy_forward.1} parent=1 // loop_footer_branch
      %16 = sbr.rel target = $region3
    $region8: #{policy_forward.1} parent=1 // loop_exit
      _
    %680 = vsyncpa [#allocation3], 1
    %s681 = scalar_lea.sflag [#allocation3], 1
    %682 = vsyncpa %s681, 1
    %683 = vsyncpa [#allocation5], 1

</llo_original>
